<compile_context>
chip_gen: v6e
topology: v6e:2x2x1
jax: 0.10.0
libtpu: 0.0.40
codegen_flags: <defaults>
</compile_context>

<pallas_src>
import jax
import jax.numpy as jnp
from jax.experimental import pallas as pl
from jax.experimental.pallas import tpu as pltpu

IN_DIM = 1000
HID_DIM = 50
OUT_DIM = 100

HID_PAD = 64     # 50 -> 64  (sublane-friendly contraction for the 2nd matmul)
OUT_PAD = 128    # 100 -> 128 (lane-dense output slab -> unmasked stores)


def _round_up(x, m):
    return ((x + m - 1) // m) * m


def _mlp_kernel(x_ref, w1_ref, b1_ref, w2_ref, b2_ref, o_ref):
    # x_ref: (TB, 1000) f32 | w1: (1000, 64) bf16 | b1: (1, 64) f32
    # w2: (64, 128) bf16    | b2: (1, 128) f32    | o: (TB, 128) f32
    x = x_ref[...].astype(jnp.bfloat16)                               # in-kernel cast (VPU, free)
    h = jnp.dot(x, w1_ref[...], preferred_element_type=jnp.float32)   # MXU, f32 acc
    h = jnp.maximum(h + b1_ref[...], 0.0)                             # bias + ReLU in f32
    # Dropout(p=0.5): identity in eval/inference mode.
    y = jnp.dot(h.astype(jnp.bfloat16), w2_ref[...],
                preferred_element_type=jnp.float32)                   # MXU, f32 acc
    o_ref[...] = (y + b2_ref[...]).astype(o_ref.dtype)


def metanet_text_forward(rel_agg, w1, b1, w2, b2, *, tb=2048):
    """rel_agg: (B, 1000) f32; w1: (1000, 50); b1: (50,) or (1, 50);
    w2: (50, 100); b2: (100,) or (1, 100)  ->  (B, 100) f32."""
    B = rel_agg.shape[0]

    # --- one-time wrapper-side layout work (weight padding + dtype) ----------
    b1 = jnp.reshape(b1, (1, HID_DIM)).astype(jnp.float32)
    b2 = jnp.reshape(b2, (1, OUT_DIM)).astype(jnp.float32)

    w1p = jnp.zeros((IN_DIM, HID_PAD), jnp.bfloat16).at[:, :HID_DIM].set(
        w1.astype(jnp.bfloat16))
    b1p = jnp.zeros((1, HID_PAD), jnp.float32).at[:, :HID_DIM].set(b1)
    w2p = jnp.zeros((HID_PAD, OUT_PAD), jnp.bfloat16).at[:HID_DIM, :OUT_DIM].set(
        w2.astype(jnp.bfloat16))
    b2p = jnp.zeros((1, OUT_PAD), jnp.float32).at[:, :OUT_DIM].set(b2)

    # --- batch tiling (no zero-pad copy of x) --------------------------------
    # Tile must be a multiple of 8 (sublane); partial last block is masked by
    # Pallas on store, so no padded copy of the (B, 1000) input is made.
    tb = max(8, min(tb, _round_up(B, 8)))
    # Prefer >=2 grid steps so the "parallel" batch axis can shard across both
    # TensorCores (v7x megacore) when the batch is large enough.
    if B >= 16 and pl.cdiv(B, tb) < 2:
        tb = _round_up(pl.cdiv(B, 2), 8)
    grid = (pl.cdiv(B, tb),)

    cost = pl.CostEstimate(
        flops=2 * B * IN_DIM * HID_PAD + 2 * B * HID_PAD * OUT_PAD,
        transcendentals=0,
        bytes_accessed=(B * IN_DIM * 4                  # x (f32, native)
                        + IN_DIM * HID_PAD * 2          # w1 (bf16)
                        + HID_PAD * OUT_PAD * 2         # w2 (bf16)
                        + (HID_PAD + OUT_PAD) * 4       # biases (f32)
                        + B * OUT_PAD * 4),             # output (f32)
    )

    out = pl.pallas_call(
        _mlp_kernel,
        out_shape=jax.ShapeDtypeStruct((B, OUT_PAD), jnp.float32),
        grid=grid,
        in_specs=[
            pl.BlockSpec((tb, IN_DIM), lambda i: (i, 0)),        # x: streamed (f32)
            pl.BlockSpec((IN_DIM, HID_PAD), lambda i: (0, 0)),   # w1: resident
            pl.BlockSpec((1, HID_PAD), lambda i: (0, 0)),        # b1: resident
            pl.BlockSpec((HID_PAD, OUT_PAD), lambda i: (0, 0)),  # w2: resident
            pl.BlockSpec((1, OUT_PAD), lambda i: (0, 0)),        # b2: resident
        ],
        out_specs=pl.BlockSpec((tb, OUT_PAD), lambda i: (i, 0)),
        compiler_params=pltpu.CompilerParams(
            dimension_semantics=("parallel",),
            vmem_limit_bytes=48 << 20),
        cost_estimate=cost,
    )(rel_agg.astype(jnp.float32), w1p, b1p, w2p, b2p)

    # Strip only the lane padding of the output feature axis (no batch pad).
    # (If this is consumed inside a larger jit, XLA fuses the slice away.)
    return out[:, :OUT_DIM]


def _xavier_normal(key, fan_in, fan_out):
    # torch.nn.init.xavier_normal_: std = sqrt(2 / (fan_in + fan_out))
    std = (2.0 / (fan_in + fan_out)) ** 0.5
    return jax.random.normal(key, (fan_in, fan_out), dtype=jnp.float32) * std


if __name__ == "__main__":
    key = jax.random.PRNGKey(0)
    k_x, k_w1, k_b1, k_w2, k_b2 = jax.random.split(key, 5)

    B = 8
    rel_agg = jax.random.normal(k_x, (B, IN_DIM), dtype=jnp.float32)

    # Parameters (xavier_normal_ weights as in __init__; PyTorch-default biases).
    w1 = _xavier_normal(k_w1, IN_DIM, HID_DIM)                        # (1000, 50)
    b1 = jax.random.uniform(k_b1, (1, HID_DIM), dtype=jnp.float32,
                            minval=-IN_DIM ** -0.5, maxval=IN_DIM ** -0.5)
    w2 = _xavier_normal(k_w2, HID_DIM, OUT_DIM)                       # (50, 100)
    b2 = jax.random.uniform(k_b2, (1, OUT_DIM), dtype=jnp.float32,
                            minval=-HID_DIM ** -0.5, maxval=HID_DIM ** -0.5)

    out = metanet_text_forward(rel_agg, w1, b1, w2, b2)
    out = jax.block_until_ready(out)
    assert out.shape == (B, OUT_DIM)

    # Reference with matching bf16 matmul operands / f32 accumulation.
    xb = rel_agg.astype(jnp.bfloat16)
    h_ref = jnp.dot(xb, w1.astype(jnp.bfloat16),
                    preferred_element_type=jnp.float32) + b1
    h_ref = jnp.maximum(h_ref, 0.0)
    ref = jnp.dot(h_ref.astype(jnp.bfloat16), w2.astype(jnp.bfloat16),
                  preferred_element_type=jnp.float32) + b2
    assert jnp.allclose(out, ref, atol=2e-2, rtol=2e-2)

    # Sanity vs. full-f32 math (loose, accounts for bf16 operand rounding).
    ref_f32 = jnp.maximum(rel_agg @ w1 + b1, 0.0) @ w2 + b2
    assert jnp.allclose(out, ref_f32, atol=1e-1, rtol=1e-1)

    print("KERNEL_OK")
</pallas_src>

<mosaic_0001>
module attributes {stable_mosaic.version = 11 : i64} {
  func.func @_mlp_kernel(%arg0: i32, %arg1: memref<8x1000xf32, #tpu.memory_space<vmem>>, %arg2: memref<1000x64xbf16, #tpu.memory_space<vmem>>, %arg3: memref<1x64xf32, #tpu.memory_space<vmem>>, %arg4: memref<64x128xbf16, #tpu.memory_space<vmem>>, %arg5: memref<1x128xf32, #tpu.memory_space<vmem>>, %arg6: memref<8x128xf32, #tpu.memory_space<vmem>>) attributes {dimension_semantics = [#tpu.dimension_semantics<parallel>], iteration_bounds = array<i64: 1>, scalar_prefetch = 0 : i64, scratch_operands = 0 : i64, tpu.core_type = #tpu.core_type<tc>, window_params = [{transform_indices = @transform_0, window_bounds = array<i64: 8, 1000>}, {pipeline_mode = #tpu.pipeline_mode<synchronous>, transform_indices = @transform_1, window_bounds = array<i64: 1000, 64>}, {pipeline_mode = #tpu.pipeline_mode<synchronous>, transform_indices = @transform_2, window_bounds = array<i64: 1, 64>}, {pipeline_mode = #tpu.pipeline_mode<synchronous>, transform_indices = @transform_3, window_bounds = array<i64: 64, 128>}, {pipeline_mode = #tpu.pipeline_mode<synchronous>, transform_indices = @transform_4, window_bounds = array<i64: 1, 128>}, {transform_indices = @transform_5, window_bounds = array<i64: 8, 128>}]} {
    %c0 = arith.constant 0 : index
    %c0_0 = arith.constant 0 : index
    %0 = vector.load %arg1[%c0, %c0_0] : memref<8x1000xf32, #tpu.memory_space<vmem>>, vector<8x1000xf32>
    %1 = arith.truncf %0 : vector<8x1000xf32> to vector<8x1000xbf16>
    %c0_1 = arith.constant 0 : index
    %c0_2 = arith.constant 0 : index
    %2 = vector.load %arg2[%c0_1, %c0_2] : memref<1000x64xbf16, #tpu.memory_space<vmem>>, vector<1000x64xbf16>
    %cst = arith.constant dense<0.000000e+00> : vector<8x64xf32>
    %3 = tpu.matmul %1, %2, %cst {dimension_numbers = #tpu.dot_dimension_numbers<[1], [0], [0], [1], [0, 0, 1, 1], [], []>} : vector<8x1000xbf16>, vector<1000x64xbf16>, vector<8x64xf32> -> vector<8x64xf32>
    %c0_3 = arith.constant 0 : index
    %c0_4 = arith.constant 0 : index
    %4 = vector.load %arg3[%c0_3, %c0_4] : memref<1x64xf32, #tpu.memory_space<vmem>>, vector<1x64xf32>
    %5 = vector.broadcast %4 : vector<1x64xf32> to vector<8x64xf32>
    %6 = arith.addf %3, %5 : vector<8x64xf32>
    %cst_5 = arith.constant 0.000000e+00 : f32
    %7 = vector.broadcast %cst_5 : f32 to vector<8x64xf32>
    %8 = arith.maximumf %6, %7 : vector<8x64xf32>
    %9 = arith.truncf %8 : vector<8x64xf32> to vector<8x64xbf16>
    %c0_6 = arith.constant 0 : index
    %c0_7 = arith.constant 0 : index
    %10 = vector.load %arg4[%c0_6, %c0_7] : memref<64x128xbf16, #tpu.memory_space<vmem>>, vector<64x128xbf16>
    %cst_8 = arith.constant dense<0.000000e+00> : vector<8x128xf32>
    %11 = tpu.matmul %9, %10, %cst_8 {dimension_numbers = #tpu.dot_dimension_numbers<[1], [0], [0], [1], [0, 0, 1, 1], [], []>} : vector<8x64xbf16>, vector<64x128xbf16>, vector<8x128xf32> -> vector<8x128xf32>
    %c0_9 = arith.constant 0 : index
    %c0_10 = arith.constant 0 : index
    %12 = vector.load %arg5[%c0_9, %c0_10] : memref<1x128xf32, #tpu.memory_space<vmem>>, vector<1x128xf32>
    %13 = vector.broadcast %12 : vector<1x128xf32> to vector<8x128xf32>
    %14 = arith.addf %11, %13 : vector<8x128xf32>
    %c0_11 = arith.constant 0 : index
    %c0_12 = arith.constant 0 : index
    %15 = vector.load %arg6[%c0_11, %c0_12] : memref<8x128xf32, #tpu.memory_space<vmem>>, vector<8x128xf32>
    tpu.vector_store %arg6[%c0_11, %c0_12], %14 {strides = array<i32>} : memref<8x128xf32, #tpu.memory_space<vmem>>, vector<8x128xf32>,
    return
  }
  func.func @transform_0(%arg0: i32) -> (i32, i32) {
    %c0_i32 = arith.constant 0 : i32
    %c0_i32_0 = arith.constant 0 : i32
    return %arg0, %c0_i32 : i32, i32
  }
  func.func @transform_1(%arg0: i32) -> (i32, i32) {
    %c0_i32 = arith.constant 0 : i32
    %c0_i32_0 = arith.constant 0 : i32
    %c0_i32_1 = arith.constant 0 : i32
    return %c0_i32, %c0_i32_0 : i32, i32
  }
  func.func @transform_2(%arg0: i32) -> (i32, i32) {
    %c0_i32 = arith.constant 0 : i32
    %c0_i32_0 = arith.constant 0 : i32
    %c0_i32_1 = arith.constant 0 : i32
    return %c0_i32, %c0_i32_0 : i32, i32
  }
  func.func @transform_3(%arg0: i32) -> (i32, i32) {
    %c0_i32 = arith.constant 0 : i32
    %c0_i32_0 = arith.constant 0 : i32
    %c0_i32_1 = arith.constant 0 : i32
    return %c0_i32, %c0_i32_0 : i32, i32
  }
  func.func @transform_4(%arg0: i32) -> (i32, i32) {
    %c0_i32 = arith.constant 0 : i32
    %c0_i32_0 = arith.constant 0 : i32
    %c0_i32_1 = arith.constant 0 : i32
    return %c0_i32, %c0_i32_0 : i32, i32
  }
  func.func @transform_5(%arg0: i32) -> (i32, i32) {
    %c0_i32 = arith.constant 0 : i32
    %c0_i32_0 = arith.constant 0 : i32
    return %arg0, %c0_i32 : i32, i32
  }
}

</mosaic_0001>

<llo_original>
// kernel: tpu_custom_call.1
$region0: #{tpu_custom_call.1}
  #allocation0 [shape = 'u32[]', space=smem, size = 0x4, offset = 0x4, fixed_abs, tag = 'smem constant byte address 0x4 - core index']
  #allocation1 [shape = 'u32[144,128]{1,0:T(1,128)}', space=vmem, size = 0x12000, scoped, tag = 'internal scratch']
  %s0 = inlined_call_operand.vmem [shape: f32[8,1000], index: 0, kind: input, shape index: {}]
  %s1 = inlined_call_operand.vmem [shape: bf16[1000,64], index: 1, kind: input, shape index: {}]
  %s2 = inlined_call_operand.vmem [shape: f32[1,64], index: 2, kind: input, shape index: {}]
  %s3 = inlined_call_operand.vmem [shape: bf16[64,128], index: 3, kind: input, shape index: {}]
  %s4 = inlined_call_operand.vmem [shape: f32[1,128], index: 4, kind: input, shape index: {}]
  %s5 = inlined_call_operand.hbm [shape: f32[8,128], index: 5, kind: output, shape index: {}]
  %s6 = sld [smem:[#allocation0]]
  $region30: #{tpu_custom_call.1} parent=0
    _
  %s8 = ssub.s32 1, %s6
  %s9 = scalar_select 0, %s8, %s6
  $region1: #{tpu_custom_call.1} parent=0
    #allocation2 [shape = 'u8[4096]{0}', space=vmem, size = 0x1000, scoped, tag = 'output window, operand 0, single buffered']
    #allocation3 [shape = 's32[1]{0}', space=sflag, size = 0x4, scoped, tag = 'scoped memory for tpu_custom_call.1']
    %10 = vsyncpa [#allocation3], 0
    // Predicated region
    $region2: #{tpu_custom_call.1} parent=1 // pred_check
      _
    $region3: #{tpu_custom_call.1} parent=1 // pred_check_branch
      %12 = sbr.rel (0) target = $region5
    $region4: #{tpu_custom_call.1} parent=1 // pred_region
      _
    $region5: #{tpu_custom_call.1} parent=1 // pred_fallthru
      _
    // Predicated region
    $region6: #{tpu_custom_call.1} parent=1 // pred_check
      _
    $region7: #{tpu_custom_call.1} parent=1 // pred_check_branch
      %14 = sbr.rel (0) target = $region9
    $region8: #{tpu_custom_call.1} parent=1 // pred_region
      _
    $region9: #{tpu_custom_call.1} parent=1 // pred_fallthru
      _
    // Predicated region
    $region10: #{tpu_custom_call.1} parent=1 // pred_check
      _
    $region11: #{tpu_custom_call.1} parent=1 // pred_check_branch
      %16 = sbr.rel (0) target = $region13
    $region12: #{tpu_custom_call.1} parent=1 // pred_region
      _
    $region13: #{tpu_custom_call.1} parent=1 // pred_fallthru
      _
    // Predicated region
    $region14: #{tpu_custom_call.1} parent=1 // pred_check
      _
    $region15: #{tpu_custom_call.1} parent=1 // pred_check_branch
      %18 = sbr.rel (0) target = $region17
    $region16: #{tpu_custom_call.1} parent=1 // pred_region
      _
    $region17: #{tpu_custom_call.1} parent=1 // pred_fallthru
      _
    // Predicated region
    $region18: #{tpu_custom_call.1} parent=1 // pred_check
      _
    $region19: #{tpu_custom_call.1} parent=1 // pred_check_branch
      %20 = sbr.rel (0) target = $region21
    $region20: #{tpu_custom_call.1} parent=1 // pred_region
      _
    $region21: #{tpu_custom_call.1} parent=1 // pred_fallthru
      _
    %v22 = vld [vmem:[%s0] sm:$0xff]
    %v23 = vld [vmem:[%s0 + $0x8] sm:$0xff]
    %v24 = vld [vmem:[%s0 + $0x10] sm:$0xff]
    %v25 = vld [vmem:[%s0 + $0x18] sm:$0xff]
    %v26 = vld [vmem:[%s0 + $0x20] sm:$0xff]
    %v27 = vld [vmem:[%s0 + $0x28] sm:$0xff]
    %v28 = vld [vmem:[%s0 + $0x30] sm:$0xff]
    %v29 = vld [vmem:[%s0 + $0x38] sm:$0xff]
    %v30 = vpack.c.bf16 %v22, %v22
    %v31 = vpack.c.bf16 %v23, %v23
    %v32 = vpack.c.bf16 %v24, %v24
    %v33 = vpack.c.bf16 %v25, %v25
    %v34 = vpack.c.bf16 %v26, %v26
    %v35 = vpack.c.bf16 %v27, %v27
    %v36 = vpack.c.bf16 %v28, %v28
    %v37 = vpack.c.bf16 %v29, %v29
    %v38 = vld [vmem:[%s1] sm:$0xf]
    %v39 = vld [vmem:[%s1 + $0x4] sm:$0xf]
    %v40 = vld [vmem:[%s1 + $0x8] sm:$0xf]
    %v41 = vld [vmem:[%s1 + $0xc] sm:$0xf]
    %v42 = vld [vmem:[%s1 + $0x10] sm:$0xf]
    %v43 = vld [vmem:[%s1 + $0x14] sm:$0xf]
    %v44 = vld [vmem:[%s1 + $0x18] sm:$0xf]
    %v45 = vld [vmem:[%s1 + $0x1c] sm:$0xf]
    %v46 = vld [vmem:[%s1 + $0x20] sm:$0xf]
    %v47 = vld [vmem:[%s1 + $0x24] sm:$0xf]
    %v48 = vld [vmem:[%s1 + $0x28] sm:$0xf]
    %v49 = vld [vmem:[%s1 + $0x2c] sm:$0xf]
    %v50 = vld [vmem:[%s1 + $0x30] sm:$0xf]
    %v51 = vld [vmem:[%s1 + $0x34] sm:$0xf]
    %v52 = vld [vmem:[%s1 + $0x38] sm:$0xf]
    %v53 = vld [vmem:[%s1 + $0x3c] sm:$0xf]
    %v54 = vld [vmem:[%s1 + $0x40] sm:$0xf]
    %v55 = vld [vmem:[%s1 + $0x44] sm:$0xf]
    %v56 = vld [vmem:[%s1 + $0x48] sm:$0xf]
    %v57 = vld [vmem:[%s1 + $0x4c] sm:$0xf]
    %v58 = vld [vmem:[%s1 + $0x50] sm:$0xf]
    %v59 = vld [vmem:[%s1 + $0x54] sm:$0xf]
    %v60 = vld [vmem:[%s1 + $0x58] sm:$0xf]
    %v61 = vld [vmem:[%s1 + $0x5c] sm:$0xf]
    %v62 = vld [vmem:[%s1 + $0x60] sm:$0xf]
    %v63 = vld [vmem:[%s1 + $0x64] sm:$0xf]
    %v64 = vld [vmem:[%s1 + $0x68] sm:$0xf]
    %v65 = vld [vmem:[%s1 + $0x6c] sm:$0xf]
    %v66 = vld [vmem:[%s1 + $0x70] sm:$0xf]
    %v67 = vld [vmem:[%s1 + $0x74] sm:$0xf]
    %v68 = vld [vmem:[%s1 + $0x78] sm:$0xf]
    %v69 = vld [vmem:[%s1 + $0x7c] sm:$0xf]
    %v70 = vld [vmem:[%s1 + $0x80] sm:$0xf]
    %v71 = vld [vmem:[%s1 + $0x84] sm:$0xf]
    %v72 = vld [vmem:[%s1 + $0x88] sm:$0xf]
    %v73 = vld [vmem:[%s1 + $0x8c] sm:$0xf]
    %v74 = vld [vmem:[%s1 + $0x90] sm:$0xf]
    %v75 = vld [vmem:[%s1 + $0x94] sm:$0xf]
    %v76 = vld [vmem:[%s1 + $0x98] sm:$0xf]
    %v77 = vld [vmem:[%s1 + $0x9c] sm:$0xf]
    %v78 = vld [vmem:[%s1 + $0xa0] sm:$0xf]
    %v79 = vld [vmem:[%s1 + $0xa4] sm:$0xf]
    %v80 = vld [vmem:[%s1 + $0xa8] sm:$0xf]
    %v81 = vld [vmem:[%s1 + $0xac] sm:$0xf]
    %v82 = vld [vmem:[%s1 + $0xb0] sm:$0xf]
    %v83 = vld [vmem:[%s1 + $0xb4] sm:$0xf]
    %v84 = vld [vmem:[%s1 + $0xb8] sm:$0xf]
    %v85 = vld [vmem:[%s1 + $0xbc] sm:$0xf]
    %v86 = vld [vmem:[%s1 + $0xc0] sm:$0xf]
    %v87 = vld [vmem:[%s1 + $0xc4] sm:$0xf]
    %v88 = vld [vmem:[%s1 + $0xc8] sm:$0xf]
    %v89 = vld [vmem:[%s1 + $0xcc] sm:$0xf]
    %v90 = vld [vmem:[%s1 + $0xd0] sm:$0xf]
    %v91 = vld [vmem:[%s1 + $0xd4] sm:$0xf]
    %v92 = vld [vmem:[%s1 + $0xd8] sm:$0xf]
    %v93 = vld [vmem:[%s1 + $0xdc] sm:$0xf]
    %v94 = vld [vmem:[%s1 + $0xe0] sm:$0xf]
    %v95 = vld [vmem:[%s1 + $0xe4] sm:$0xf]
    %v96 = vld [vmem:[%s1 + $0xe8] sm:$0xf]
    %v97 = vld [vmem:[%s1 + $0xec] sm:$0xf]
    %v98 = vld [vmem:[%s1 + $0xf0] sm:$0xf]
    %v99 = vld [vmem:[%s1 + $0xf4] sm:$0xf]
    %v100 = vld [vmem:[%s1 + $0xf8] sm:$0xf]
    %v101 = vld [vmem:[%s1 + $0xfc] sm:$0xf]
    %v102 = vld [vmem:[%s1 + $0x100] sm:$0xf]
    %v103 = vld [vmem:[%s1 + $0x104] sm:$0xf]
    %v104 = vld [vmem:[%s1 + $0x108] sm:$0xf]
    %v105 = vld [vmem:[%s1 + $0x10c] sm:$0xf]
    %v106 = vld [vmem:[%s1 + $0x110] sm:$0xf]
    %v107 = vld [vmem:[%s1 + $0x114] sm:$0xf]
    %v108 = vld [vmem:[%s1 + $0x118] sm:$0xf]
    %v109 = vld [vmem:[%s1 + $0x11c] sm:$0xf]
    %v110 = vld [vmem:[%s1 + $0x120] sm:$0xf]
    %v111 = vld [vmem:[%s1 + $0x124] sm:$0xf]
    %v112 = vld [vmem:[%s1 + $0x128] sm:$0xf]
    %v113 = vld [vmem:[%s1 + $0x12c] sm:$0xf]
    %v114 = vld [vmem:[%s1 + $0x130] sm:$0xf]
    %v115 = vld [vmem:[%s1 + $0x134] sm:$0xf]
    %v116 = vld [vmem:[%s1 + $0x138] sm:$0xf]
    %v117 = vld [vmem:[%s1 + $0x13c] sm:$0xf]
    %v118 = vld [vmem:[%s1 + $0x140] sm:$0xf]
    %v119 = vld [vmem:[%s1 + $0x144] sm:$0xf]
    %v120 = vld [vmem:[%s1 + $0x148] sm:$0xf]
    %v121 = vld [vmem:[%s1 + $0x14c] sm:$0xf]
    %v122 = vld [vmem:[%s1 + $0x150] sm:$0xf]
    %v123 = vld [vmem:[%s1 + $0x154] sm:$0xf]
    %v124 = vld [vmem:[%s1 + $0x158] sm:$0xf]
    %v125 = vld [vmem:[%s1 + $0x15c] sm:$0xf]
    %v126 = vld [vmem:[%s1 + $0x160] sm:$0xf]
    %v127 = vld [vmem:[%s1 + $0x164] sm:$0xf]
    %v128 = vld [vmem:[%s1 + $0x168] sm:$0xf]
    %v129 = vld [vmem:[%s1 + $0x16c] sm:$0xf]
    %v130 = vld [vmem:[%s1 + $0x170] sm:$0xf]
    %v131 = vld [vmem:[%s1 + $0x174] sm:$0xf]
    %v132 = vld [vmem:[%s1 + $0x178] sm:$0xf]
    %v133 = vld [vmem:[%s1 + $0x17c] sm:$0xf]
    %v134 = vld [vmem:[%s1 + $0x180] sm:$0xf]
    %v135 = vld [vmem:[%s1 + $0x184] sm:$0xf]
    %v136 = vld [vmem:[%s1 + $0x188] sm:$0xf]
    %v137 = vld [vmem:[%s1 + $0x18c] sm:$0xf]
    %v138 = vld [vmem:[%s1 + $0x190] sm:$0xf]
    %v139 = vld [vmem:[%s1 + $0x194] sm:$0xf]
    %v140 = vld [vmem:[%s1 + $0x198] sm:$0xf]
    %v141 = vld [vmem:[%s1 + $0x19c] sm:$0xf]
    %v142 = vld [vmem:[%s1 + $0x1a0] sm:$0xf]
    %v143 = vld [vmem:[%s1 + $0x1a4] sm:$0xf]
    %v144 = vld [vmem:[%s1 + $0x1a8] sm:$0xf]
    %v145 = vld [vmem:[%s1 + $0x1ac] sm:$0xf]
    %v146 = vld [vmem:[%s1 + $0x1b0] sm:$0xf]
    %v147 = vld [vmem:[%s1 + $0x1b4] sm:$0xf]
    %v148 = vld [vmem:[%s1 + $0x1b8] sm:$0xf]
    %v149 = vld [vmem:[%s1 + $0x1bc] sm:$0xf]
    %v150 = vld [vmem:[%s1 + $0x1c0] sm:$0xf]
    %v151 = vld [vmem:[%s1 + $0x1c4] sm:$0xf]
    %v152 = vld [vmem:[%s1 + $0x1c8] sm:$0xf]
    %v153 = vld [vmem:[%s1 + $0x1cc] sm:$0xf]
    %v154 = vld [vmem:[%s1 + $0x1d0] sm:$0xf]
    %v155 = vld [vmem:[%s1 + $0x1d4] sm:$0xf]
    %v156 = vld [vmem:[%s1 + $0x1d8] sm:$0xf]
    %v157 = vld [vmem:[%s1 + $0x1dc] sm:$0xf]
    %v158 = vld [vmem:[%s1 + $0x1e0] sm:$0xf]
    %v159 = vld [vmem:[%s1 + $0x1e4] sm:$0xf]
    %v160 = vld [vmem:[%s1 + $0x1e8] sm:$0xf]
    %v161 = vld [vmem:[%s1 + $0x1ec] sm:$0xf]
    %v162 = vld [vmem:[%s1 + $0x1f0] sm:$0xf]
    %v163 = vld [vmem:[%s2] sm:$0x1]
    %v165 = vlaneseq
    %v166 = vshrl.u32 %v165, 7
    %v167 = vsub.s32 0, %v166
    %v168 = vrot.slane %v163, %v167
    %v295 = vunpack.c.l.b16 %v38
    %v296 = vunpack.c.l.b16 %v39
    %v297 = vunpack.c.l.b16 %v40
    %v298 = vunpack.c.l.b16 %v41
    %v299 = vunpack.c.l.b16 %v42
    %v300 = vunpack.c.l.b16 %v43
    %v301 = vunpack.c.l.b16 %v44
    %v302 = vunpack.c.l.b16 %v45
    %v303 = vunpack.c.l.b16 %v46
    %v304 = vunpack.c.l.b16 %v47
    %v305 = vunpack.c.l.b16 %v48
    %v306 = vunpack.c.l.b16 %v49
    %v307 = vunpack.c.l.b16 %v50
    %v308 = vunpack.c.l.b16 %v51
    %v309 = vunpack.c.l.b16 %v52
    %v310 = vunpack.c.l.b16 %v53
    %v311 = vunpack.c.l.b16 %v54
    %v312 = vunpack.c.l.b16 %v55
    %v313 = vunpack.c.l.b16 %v56
    %v314 = vunpack.c.l.b16 %v57
    %v315 = vunpack.c.l.b16 %v58
    %v316 = vunpack.c.l.b16 %v59
    %v317 = vunpack.c.l.b16 %v60
    %v318 = vunpack.c.l.b16 %v61
    %v319 = vunpack.c.l.b16 %v62
    %v320 = vunpack.c.l.b16 %v63
    %v321 = vunpack.c.l.b16 %v64
    %v322 = vunpack.c.l.b16 %v65
    %v323 = vunpack.c.l.b16 %v66
    %v324 = vunpack.c.l.b16 %v67
    %v325 = vunpack.c.l.b16 %v68
    %v326 = vunpack.c.l.b16 %v69
    %v327 = vunpack.c.l.b16 %v70
    %v328 = vunpack.c.l.b16 %v71
    %v329 = vunpack.c.l.b16 %v72
    %v330 = vunpack.c.l.b16 %v73
    %v331 = vunpack.c.l.b16 %v74
    %v332 = vunpack.c.l.b16 %v75
    %v333 = vunpack.c.l.b16 %v76
    %v334 = vunpack.c.l.b16 %v77
    %v335 = vunpack.c.l.b16 %v78
    %v336 = vunpack.c.l.b16 %v79
    %v337 = vunpack.c.l.b16 %v80
    %v338 = vunpack.c.l.b16 %v81
    %v339 = vunpack.c.l.b16 %v82
    %v340 = vunpack.c.l.b16 %v83
    %v341 = vunpack.c.l.b16 %v84
    %v342 = vunpack.c.l.b16 %v85
    %v343 = vunpack.c.l.b16 %v86
    %v344 = vunpack.c.l.b16 %v87
    %v345 = vunpack.c.l.b16 %v88
    %v346 = vunpack.c.l.b16 %v89
    %v347 = vunpack.c.l.b16 %v90
    %v348 = vunpack.c.l.b16 %v91
    %v349 = vunpack.c.l.b16 %v92
    %v350 = vunpack.c.l.b16 %v93
    %v351 = vunpack.c.l.b16 %v94
    %v352 = vunpack.c.l.b16 %v95
    %v353 = vunpack.c.l.b16 %v96
    %v354 = vunpack.c.l.b16 %v97
    %v355 = vunpack.c.l.b16 %v98
    %v356 = vunpack.c.l.b16 %v99
    %v357 = vunpack.c.l.b16 %v100
    %v358 = vunpack.c.l.b16 %v101
    %v359 = vunpack.c.l.b16 %v102
    %v360 = vunpack.c.l.b16 %v103
    %v361 = vunpack.c.l.b16 %v104
    %v362 = vunpack.c.l.b16 %v105
    %v363 = vunpack.c.l.b16 %v106
    %v364 = vunpack.c.l.b16 %v107
    %v365 = vunpack.c.l.b16 %v108
    %v366 = vunpack.c.l.b16 %v109
    %v367 = vunpack.c.l.b16 %v110
    %v368 = vunpack.c.l.b16 %v111
    %v369 = vunpack.c.l.b16 %v112
    %v370 = vunpack.c.l.b16 %v113
    %v371 = vunpack.c.l.b16 %v114
    %v372 = vunpack.c.l.b16 %v115
    %v373 = vunpack.c.l.b16 %v116
    %v374 = vunpack.c.l.b16 %v117
    %v375 = vunpack.c.l.b16 %v118
    %v376 = vunpack.c.l.b16 %v119
    %v377 = vunpack.c.l.b16 %v120
    %v378 = vunpack.c.l.b16 %v121
    %v379 = vunpack.c.l.b16 %v122
    %v380 = vunpack.c.l.b16 %v123
    %v381 = vunpack.c.l.b16 %v124
    %v382 = vunpack.c.l.b16 %v125
    %v383 = vunpack.c.l.b16 %v126
    %v384 = vunpack.c.l.b16 %v127
    %v385 = vunpack.c.l.b16 %v128
    %v386 = vunpack.c.l.b16 %v129
    %v387 = vunpack.c.l.b16 %v130
    %v388 = vunpack.c.l.b16 %v131
    %v389 = vunpack.c.l.b16 %v132
    %v390 = vunpack.c.l.b16 %v133
    %v391 = vunpack.c.l.b16 %v134
    %v392 = vunpack.c.l.b16 %v135
    %v393 = vunpack.c.l.b16 %v136
    %v394 = vunpack.c.l.b16 %v137
    %v395 = vunpack.c.l.b16 %v138
    %v396 = vunpack.c.l.b16 %v139
    %v397 = vunpack.c.l.b16 %v140
    %v398 = vunpack.c.l.b16 %v141
    %v399 = vunpack.c.l.b16 %v142
    %v400 = vunpack.c.l.b16 %v143
    %v401 = vunpack.c.l.b16 %v144
    %v402 = vunpack.c.l.b16 %v145
    %v403 = vunpack.c.l.b16 %v146
    %v404 = vunpack.c.l.b16 %v147
    %v405 = vunpack.c.l.b16 %v148
    %v406 = vunpack.c.l.b16 %v149
    %v407 = vunpack.c.l.b16 %v150
    %v408 = vunpack.c.l.b16 %v151
    %v409 = vunpack.c.l.b16 %v152
    %v410 = vunpack.c.l.b16 %v153
    %v411 = vunpack.c.l.b16 %v154
    %v412 = vunpack.c.l.b16 %v155
    %v413 = vunpack.c.l.b16 %v156
    %v414 = vunpack.c.l.b16 %v157
    %v415 = vunpack.c.l.b16 %v158
    %v416 = vunpack.c.l.b16 %v159
    %v417 = vunpack.c.l.b16 %v160
    %v418 = vunpack.c.l.b16 %v161
    %v419 = vunpack.c.l.b16 %v162
    %v420 = vpack.c.b16 %v296, %v295
    %v421 = vpack.c.b16 %v298, %v297
    %v422 = vpack.c.b16 %v300, %v299
    %v423 = vpack.c.b16 %v302, %v301
    %v424 = vpack.c.b16 %v304, %v303
    %v425 = vpack.c.b16 %v306, %v305
    %v426 = vpack.c.b16 %v308, %v307
    %v427 = vpack.c.b16 %v310, %v309
    %v428 = vpack.c.b16 %v312, %v311
    %v429 = vpack.c.b16 %v314, %v313
    %v430 = vpack.c.b16 %v316, %v315
    %v431 = vpack.c.b16 %v318, %v317
    %v432 = vpack.c.b16 %v320, %v319
    %v433 = vpack.c.b16 %v322, %v321
    %v434 = vpack.c.b16 %v324, %v323
    %v435 = vpack.c.b16 %v326, %v325
    %v436 = vpack.c.b16 %v328, %v327
    %v437 = vpack.c.b16 %v330, %v329
    %v438 = vpack.c.b16 %v332, %v331
    %v439 = vpack.c.b16 %v334, %v333
    %v440 = vpack.c.b16 %v336, %v335
    %v441 = vpack.c.b16 %v338, %v337
    %v442 = vpack.c.b16 %v340, %v339
    %v443 = vpack.c.b16 %v342, %v341
    %v444 = vpack.c.b16 %v344, %v343
    %v445 = vpack.c.b16 %v346, %v345
    %v446 = vpack.c.b16 %v348, %v347
    %v447 = vpack.c.b16 %v350, %v349
    %v448 = vpack.c.b16 %v352, %v351
    %v449 = vpack.c.b16 %v354, %v353
    %v450 = vpack.c.b16 %v356, %v355
    %v451 = vpack.c.b16 %v358, %v357
    %v452 = vpack.c.b16 %v360, %v359
    %v453 = vpack.c.b16 %v362, %v361
    %v454 = vpack.c.b16 %v364, %v363
    %v455 = vpack.c.b16 %v366, %v365
    %v456 = vpack.c.b16 %v368, %v367
    %v457 = vpack.c.b16 %v370, %v369
    %v458 = vpack.c.b16 %v372, %v371
    %v459 = vpack.c.b16 %v374, %v373
    %v460 = vpack.c.b16 %v376, %v375
    %v461 = vpack.c.b16 %v378, %v377
    %v462 = vpack.c.b16 %v380, %v379
    %v463 = vpack.c.b16 %v382, %v381
    %v464 = vpack.c.b16 %v384, %v383
    %v465 = vpack.c.b16 %v386, %v385
    %v466 = vpack.c.b16 %v388, %v387
    %v467 = vpack.c.b16 %v390, %v389
    %v468 = vpack.c.b16 %v392, %v391
    %v469 = vpack.c.b16 %v394, %v393
    %v470 = vpack.c.b16 %v396, %v395
    %v471 = vpack.c.b16 %v398, %v397
    %v472 = vpack.c.b16 %v400, %v399
    %v473 = vpack.c.b16 %v402, %v401
    %v474 = vpack.c.b16 %v404, %v403
    %v475 = vpack.c.b16 %v406, %v405
    %v476 = vpack.c.b16 %v408, %v407
    %v477 = vpack.c.b16 %v410, %v409
    %v478 = vpack.c.b16 %v412, %v411
    %v479 = vpack.c.b16 %v414, %v413
    %v480 = vpack.c.b16 %v416, %v415
    %v481 = vpack.c.b16 %v418, %v417
    %v482 = vpack.c.b16 %v419, %v419
    %vm545 = vcmask 850944
    %v547 = vsel %vm545, %v37, 0
    %vm549 = vcmask 1043456
    %v551 = vsel %vm549, %v482, 0
    %553 = vmatprep.subr.bf16.mxu0 0
    %554 = vmatpush1.bf16.msra.mxu0 %v427
    %555 = vmatprep.subr.bf16.mxu0 0
    %556 = vmatpush1.bf16.msra.mxu0 %v426
    %557 = vmatprep.subr.bf16.mxu0 0
    %558 = vmatpush1.bf16.msra.mxu0 %v425
    %559 = vmatprep.subr.bf16.mxu0 0
    %560 = vmatpush1.bf16.msra.mxu0 %v424
    %561 = vmatprep.subr.bf16.mxu0 0
    %562 = vmatpush1.bf16.msra.mxu0 %v423
    %563 = vmatprep.subr.bf16.mxu0 0
    %564 = vmatpush1.bf16.msra.mxu0 %v422
    %565 = vmatprep.subr.bf16.mxu0 0
    %566 = vmatpush1.bf16.msra.mxu0 %v421
    %567 = vmatprep.subr.bf16.mxu0 0
    %568 = vmatpush1.bf16.msra.mxu0 %v420
    %569 = vmatprep.subr.bf16.mxu0 0
    %570 = vmatpush2.bf16.msra.mxu0 %v435
    %571 = vmatprep.subr.bf16.mxu0 0
    %572 = vmatpush2.bf16.msra.mxu0 %v434
    %573 = vmatprep.subr.bf16.mxu0 0
    %574 = vmatpush2.bf16.msra.mxu0 %v433
    %575 = vmatprep.subr.bf16.mxu0 0
    %576 = vmatpush2.bf16.msra.mxu0 %v432
    %577 = vmatprep.subr.bf16.mxu0 0
    %578 = vmatpush2.bf16.msra.mxu0 %v431
    %579 = vmatprep.subr.bf16.mxu0 0
    %580 = vmatpush2.bf16.msra.mxu0 %v430
    %581 = vmatprep.subr.bf16.mxu0 0
    %582 = vmatpush2.bf16.msra.mxu0 %v429
    %583 = vmatprep.subr.bf16.mxu0 0
    %584 = vmatpush2.bf16.msra.mxu0 %v428
    %585 = vmatprep.mubr.bf16.mxu0 %v31
    %586 = vmatmul.mubr.bf16.gmra.mxu0 %v30
    %v587 = vpop.f32.mrf.mxu0
    %v588 = vadd.f32 %v168, %v587
    %v589 = vpop.f32.mrf.mxu0
    %v590 = vpop.f32.mrf.mxu0
    %v591 = vpop.f32.mrf.mxu0
    %592 = vdwg.mxu0
    %593 = vmatprep.subr.bf16.mxu0 0
    %594 = vmatpush1.bf16.msra.mxu0 %v443
    %595 = vmatprep.subr.bf16.mxu0 0
    %596 = vmatpush1.bf16.msra.mxu0 %v442
    %597 = vmatprep.subr.bf16.mxu0 0
    %598 = vmatpush1.bf16.msra.mxu0 %v441
    %599 = vmatprep.subr.bf16.mxu0 0
    %600 = vmatpush1.bf16.msra.mxu0 %v440
    %601 = vmatprep.subr.bf16.mxu0 0
    %602 = vmatpush1.bf16.msra.mxu0 %v439
    %603 = vmatprep.subr.bf16.mxu0 0
    %604 = vmatpush1.bf16.msra.mxu0 %v438
    %605 = vmatprep.subr.bf16.mxu0 0
    %606 = vmatpush1.bf16.msra.mxu0 %v437
    %607 = vmatprep.subr.bf16.mxu0 0
    %608 = vmatpush1.bf16.msra.mxu0 %v436
    %609 = vmatprep.subr.bf16.mxu0 0
    %610 = vmatpush2.bf16.msra.mxu0 %v451
    %611 = vmatprep.subr.bf16.mxu0 0
    %612 = vmatpush2.bf16.msra.mxu0 %v450
    %613 = vmatprep.subr.bf16.mxu0 0
    %614 = vmatpush2.bf16.msra.mxu0 %v449
    %615 = vmatprep.subr.bf16.mxu0 0
    %616 = vmatpush2.bf16.msra.mxu0 %v448
    %617 = vmatprep.subr.bf16.mxu0 0
    %618 = vmatpush2.bf16.msra.mxu0 %v447
    %619 = vmatprep.subr.bf16.mxu0 0
    %620 = vmatpush2.bf16.msra.mxu0 %v446
    %621 = vmatprep.subr.bf16.mxu0 0
    %622 = vmatpush2.bf16.msra.mxu0 %v445
    %623 = vmatprep.subr.bf16.mxu0 0
    %624 = vmatpush2.bf16.msra.mxu0 %v444
    %625 = vmatprep.mubr.bf16.mxu0 %v33
    %626 = vmatmul.mubr.bf16.gmra.mxu0 %v32
    %v627 = vpop.f32.mrf.mxu0
    %v628 = vadd.f32 %v588, %v627
    %v629 = vpop.f32.mrf.mxu0
    %v630 = vpop.f32.mrf.mxu0
    %v631 = vpop.f32.mrf.mxu0
    %632 = vdwg.mxu0
    %633 = vmatprep.subr.bf16.mxu0 0
    %634 = vmatpush1.bf16.msra.mxu0 %v459
    %635 = vmatprep.subr.bf16.mxu0 0
    %636 = vmatpush1.bf16.msra.mxu0 %v458
    %637 = vmatprep.subr.bf16.mxu0 0
    %638 = vmatpush1.bf16.msra.mxu0 %v457
    %639 = vmatprep.subr.bf16.mxu0 0
    %640 = vmatpush1.bf16.msra.mxu0 %v456
    %641 = vmatprep.subr.bf16.mxu0 0
    %642 = vmatpush1.bf16.msra.mxu0 %v455
    %643 = vmatprep.subr.bf16.mxu0 0
    %644 = vmatpush1.bf16.msra.mxu0 %v454
    %645 = vmatprep.subr.bf16.mxu0 0
    %646 = vmatpush1.bf16.msra.mxu0 %v453
    %647 = vmatprep.subr.bf16.mxu0 0
    %648 = vmatpush1.bf16.msra.mxu0 %v452
    %649 = vmatprep.subr.bf16.mxu0 0
    %650 = vmatpush2.bf16.msra.mxu0 %v467
    %651 = vmatprep.subr.bf16.mxu0 0
    %652 = vmatpush2.bf16.msra.mxu0 %v466
    %653 = vmatprep.subr.bf16.mxu0 0
    %654 = vmatpush2.bf16.msra.mxu0 %v465
    %655 = vmatprep.subr.bf16.mxu0 0
    %656 = vmatpush2.bf16.msra.mxu0 %v464
    %657 = vmatprep.subr.bf16.mxu0 0
    %658 = vmatpush2.bf16.msra.mxu0 %v463
    %659 = vmatprep.subr.bf16.mxu0 0
    %660 = vmatpush2.bf16.msra.mxu0 %v462
    %661 = vmatprep.subr.bf16.mxu0 0
    %662 = vmatpush2.bf16.msra.mxu0 %v461
    %663 = vmatprep.subr.bf16.mxu0 0
    %664 = vmatpush2.bf16.msra.mxu0 %v460
    %665 = vmatprep.mubr.bf16.mxu0 %v35
    %666 = vmatmul.mubr.bf16.gmra.mxu0 %v34
    %v667 = vpop.f32.mrf.mxu0
    %v668 = vadd.f32 %v628, %v667
    %v669 = vpop.f32.mrf.mxu0
    %v670 = vpop.f32.mrf.mxu0
    %v671 = vpop.f32.mrf.mxu0
    %672 = vdwg.mxu0
    %673 = vmatprep.subr.bf16.mxu0 0
    %674 = vmatpush1.bf16.msra.mxu0 %v475
    %675 = vmatprep.subr.bf16.mxu0 0
    %676 = vmatpush1.bf16.msra.mxu0 %v474
    %677 = vmatprep.subr.bf16.mxu0 0
    %678 = vmatpush1.bf16.msra.mxu0 %v473
    %679 = vmatprep.subr.bf16.mxu0 0
    %680 = vmatpush1.bf16.msra.mxu0 %v472
    %681 = vmatprep.subr.bf16.mxu0 0
    %682 = vmatpush1.bf16.msra.mxu0 %v471
    %683 = vmatprep.subr.bf16.mxu0 0
    %684 = vmatpush1.bf16.msra.mxu0 %v470
    %685 = vmatprep.subr.bf16.mxu0 0
    %686 = vmatpush1.bf16.msra.mxu0 %v469
    %687 = vmatprep.subr.bf16.mxu0 0
    %688 = vmatpush1.bf16.msra.mxu0 %v468
    %689 = vmatprep.subr.bf16.mxu0 0
    %690 = vmatpush2.bf16.msra.mxu0 0
    %691 = vmatprep.subr.bf16.mxu0 0
    %692 = vmatpush2.bf16.msra.mxu0 %v551
    %693 = vmatprep.subr.bf16.mxu0 0
    %694 = vmatpush2.bf16.msra.mxu0 %v481
    %695 = vmatprep.subr.bf16.mxu0 0
    %696 = vmatpush2.bf16.msra.mxu0 %v480
    %697 = vmatprep.subr.bf16.mxu0 0
    %698 = vmatpush2.bf16.msra.mxu0 %v479
    %699 = vmatprep.subr.bf16.mxu0 0
    %700 = vmatpush2.bf16.msra.mxu0 %v478
    %701 = vmatprep.subr.bf16.mxu0 0
    %702 = vmatpush2.bf16.msra.mxu0 %v477
    %703 = vmatprep.subr.bf16.mxu0 0
    %704 = vmatpush2.bf16.msra.mxu0 %v476
    %705 = vmatprep.mubr.bf16.mxu0 %v547
    %706 = vmatmul.mubr.bf16.gmra.mxu0 %v36
    %v707 = vpop.f32.mrf.mxu0
    %v708 = vadd.f32 %v668, %v707
    %v709 = vpop.f32.mrf.mxu0
    %v710 = vpop.f32.mrf.mxu0
    %v711 = vpop.f32.mrf.mxu0
    %712 = vdwg.mxu0
    %v713 = vmax.f32 %v708, 0.0
    %v714 = vpack.c.bf16 %v713, %v713
    %v715 = vld [vmem:[%s3] sm:$0xf]
    %v716 = vld [vmem:[%s3 + $0x4] sm:$0xf]
    %v717 = vld [vmem:[%s3 + $0x8] sm:$0xf]
    %v718 = vld [vmem:[%s3 + $0xc] sm:$0xf]
    %v719 = vld [vmem:[%s3 + $0x10] sm:$0xf]
    %v720 = vld [vmem:[%s3 + $0x14] sm:$0xf]
    %v721 = vld [vmem:[%s3 + $0x18] sm:$0xf]
    %v722 = vld [vmem:[%s3 + $0x1c] sm:$0xf]
    %v723 = vld [vmem:[%s4] sm:$0x1]
    %v725 = vlaneseq
    %v726 = vshrl.u32 %v725, 7
    %v727 = vsub.s32 0, %v726
    %v728 = vrot.slane %v723, %v727
    %v738 = vunpack.c.l.b16 %v715
    %v739 = vunpack.c.l.b16 %v716
    %v740 = vunpack.c.l.b16 %v717
    %v741 = vunpack.c.l.b16 %v718
    %v742 = vunpack.c.l.b16 %v719
    %v743 = vunpack.c.l.b16 %v720
    %v744 = vunpack.c.l.b16 %v721
    %v745 = vunpack.c.l.b16 %v722
    %v746 = vpack.c.b16 %v739, %v738
    %v747 = vpack.c.b16 %v741, %v740
    %v748 = vpack.c.b16 %v743, %v742
    %v749 = vpack.c.b16 %v745, %v744
    %vm754 = vcmask 523264
    %v756 = vsel %vm754, %v714, 0
    %758 = vmatprep.subr.bf16.mxu0 0
    %759 = vmatpush1.bf16.msra.mxu0 0
    %760 = vmatprep.subr.bf16.mxu0 0
    %761 = vmatpush1.bf16.msra.mxu0 0
    %762 = vmatprep.subr.bf16.mxu0 0
    %763 = vmatpush1.bf16.msra.mxu0 0
    %764 = vmatprep.subr.bf16.mxu0 0
    %765 = vmatpush1.bf16.msra.mxu0 0
    %766 = vmatprep.subr.bf16.mxu0 0
    %767 = vmatpush1.bf16.msra.mxu0 %v749
    %768 = vmatprep.subr.bf16.mxu0 0
    %769 = vmatpush1.bf16.msra.mxu0 %v748
    %770 = vmatprep.subr.bf16.mxu0 0
    %771 = vmatpush1.bf16.msra.mxu0 %v747
    %772 = vmatprep.subr.bf16.mxu0 0
    %773 = vmatpush1.bf16.msra.mxu0 %v746
    %774 = vmatprep.subr.bf16.mxu0 0
    %775 = vmatpush2.bf16.msra.mxu0 0
    %776 = vmatprep.subr.bf16.mxu0 0
    %777 = vmatpush2.bf16.msra.mxu0 0
    %778 = vmatprep.subr.bf16.mxu0 0
    %779 = vmatpush2.bf16.msra.mxu0 0
    %780 = vmatprep.subr.bf16.mxu0 0
    %781 = vmatpush2.bf16.msra.mxu0 0
    %782 = vmatprep.subr.bf16.mxu0 0
    %783 = vmatpush2.bf16.msra.mxu0 0
    %784 = vmatprep.subr.bf16.mxu0 0
    %785 = vmatpush2.bf16.msra.mxu0 0
    %786 = vmatprep.subr.bf16.mxu0 0
    %787 = vmatpush2.bf16.msra.mxu0 0
    %788 = vmatprep.subr.bf16.mxu0 0
    %789 = vmatpush2.bf16.msra.mxu0 0
    %790 = vmatprep.mubr.bf16.mxu0 0
    %791 = vmatmul.mubr.bf16.gmra.mxu0 %v756
    %v792 = vpop.f32.mrf.mxu0
    %v793 = vadd.f32 %v728, %v792
    %v794 = vpop.f32.mrf.mxu0
    %v795 = vpop.f32.mrf.mxu0
    %v796 = vpop.f32.mrf.mxu0
    %797 = vdwg.mxu0
    %798 = vst [vmem:[#allocation2] sm:$0xff] %v793
    // Predicated region
    $region22: #{tpu_custom_call.1} parent=1 // pred_check
      _
    $region23: #{tpu_custom_call.1} parent=1 // pred_check_branch
      %800 = sbr.rel (0) target = $region25
    $region24: #{tpu_custom_call.1} parent=1 // pred_region
      %s802 = ssub.s32 128, 128
      %803 = vsyncadd [#allocation3], %s802
      %s805 = sshll.u32 [#allocation2], 4
      %s806 = int_to_ptr.vmem [resolvable:$true] %s805
      %808 = dma.vmem_to_hbm [thread:$0]  %s806, 128, %s5, [#allocation3]
    $region25: #{tpu_custom_call.1} parent=1 // pred_fallthru
      _
    // Predicated region
    $region26: #{tpu_custom_call.1} parent=1 // pred_check
      _
    $region27: #{tpu_custom_call.1} parent=1 // pred_check_branch
      %810 = sbr.rel (0) target = $region29
    $region28: #{tpu_custom_call.1} parent=1 // pred_region
      %811 = dma.done [#allocation3], 128
    $region29: #{tpu_custom_call.1} parent=1 // pred_fallthru
      _
    %812 = vsyncpa [#allocation3], 1

</llo_original>
